<compile_context>
chip_gen: v5e
topology: v5e:2x2
jax: 0.10.0
libtpu: 0.0.40
codegen_flags: <defaults>
</compile_context>

<pallas_src>
import functools

import jax
import jax.numpy as jnp
from jax.experimental import pallas as pl
from jax.experimental.pallas import tpu as pltpu

NEURONS_PER_LAYER = 32
NUM_LAYER = 4
IN_FEATURES = 9
OUT_FEATURES = 3


def _softplus(x, beta):
    # Matches torch.nn.Softplus(beta=beta, threshold=20):
    #   (1/beta) * log(1 + exp(beta*x))  if beta*x <= 20, else x (linear region).
    # Overflow-safe: exp argument is always <= 0; multiply by 1/beta instead of divide.
    inv_beta = 1.0 / beta
    z = x * beta
    sp = jnp.maximum(x, 0.0) + jnp.log(1.0 + jnp.exp(-jnp.abs(z))) * inv_beta
    return jnp.where(z > 20.0, x, sp)


def mlp_kernel(y_ref, w1_ref, b1_ref, wb_ref, bb_ref, w3_ref, b3_ref, out_ref,
               *, num_layer):
    # Activations stay [tb, pack*H] (lane-dense) for the whole fused forward pass.
    h = jnp.dot(y_ref[...], w1_ref[...], preferred_element_type=jnp.float32) + b1_ref[...]
    h = _softplus(h, 1000.0)

    for i in range(num_layer):                               # static unroll (chain dep)
        h = jnp.dot(h, wb_ref[i], preferred_element_type=jnp.float32) + bb_ref[i]
        h = _softplus(h, 10.0)

    out = jnp.dot(h, w3_ref[...], preferred_element_type=jnp.float32) + b3_ref[...]
    out_ref[...] = out.astype(out_ref.dtype)


def _block_diag(w, pack):
    """[din, dout] -> [pack*din, pack*dout] with `w` repeated on the diagonal."""
    din, dout = w.shape
    eye = jnp.eye(pack, dtype=w.dtype)
    blocks = eye[:, :, None, None] * w[None, None, :, :]     # [pack, pack, din, dout]
    return blocks.transpose(0, 2, 1, 3).reshape(pack * din, pack * dout)


def _round_up(x, m):
    return -(-x // m) * m


def _default_pack():
    # 8-way packing (256-wide hidden) fills the 256x256 MXU on v6e/v7x;
    # 4-way (128-wide hidden) exactly fills a vreg lane group / one v5e MXU tile.
    try:
        kind = jax.devices()[0].device_kind.lower()
        if any(tag in kind for tag in ("v6", "6e", "v7", "7x")):
            return 8
    except Exception:
        pass
    return 4


def mlp_pure_simple(y, params, *, tb=512, pack=None):
    """y: [B, 9] float32 -> [B, 3] float32."""
    w1, b1, wb, bb, w3, b3 = params
    B = y.shape[0]
    H = w1.shape[1]
    num_layer = wb.shape[0]
    if pack is None:
        pack = _default_pack()

    # ---- lane packing: fold `pack` batch rows into one vector row via block-diag weights
    w1p = _block_diag(w1, pack)                              # [pack*9,  pack*H]
    wbp = jax.vmap(lambda m: _block_diag(m, pack))(wb)       # [L, pack*H, pack*H]
    w3p = _block_diag(w3, pack)                              # [pack*H,  pack*3]
    b1p = jnp.tile(b1, (1, pack))                            # [1, pack*H]
    bbp = jnp.tile(bb, (1, pack)).reshape(num_layer, 1, pack * H)   # [L, 1, pack*H]
    b3p = jnp.tile(b3, (1, pack))                            # [1, pack*3]

    Hp = pack * H
    inp = pack * IN_FEATURES
    outp = pack * OUT_FEATURES

    # ---- tile sizing: clamp tb to the packed batch (multiple of 8 sublanes),
    # pad the batch so the grid tiles evenly; padded rows are sliced off at the end.
    bpk_min = _round_up(B, pack) // pack
    tb = max(8, min(tb, _round_up(bpk_min, 8)))
    rows_per_step = tb * pack
    B_pad = _round_up(B, rows_per_step)
    if B_pad != B:
        y = jnp.pad(y, ((0, B_pad - B), (0, 0)))
    bpk = B_pad // pack                                      # packed rows
    grid = bpk // tb

    yp = y.reshape(bpk, inp)                                 # [bpk, pack*9]  (free reshape)

    kernel = functools.partial(mlp_kernel, num_layer=num_layer)

    cost = pl.CostEstimate(
        flops=2 * B_pad * (IN_FEATURES * H + num_layer * H * H + H * OUT_FEATURES),
        transcendentals=2 * B_pad * H * (num_layer + 1),
        bytes_accessed=4 * (yp.size + bpk * outp + w1p.size + wbp.size + w3p.size
                            + b1p.size + bbp.size + b3p.size),
    )

    out_packed = pl.pallas_call(
        kernel,
        out_shape=jax.ShapeDtypeStruct((bpk, outp), jnp.float32),
        grid_spec=pltpu.PrefetchScalarGridSpec(
            num_scalar_prefetch=0,
            grid=(grid,),
            in_specs=[
                pl.BlockSpec((tb, inp), lambda i: (i, 0)),                  # packed input tile
                pl.BlockSpec((inp, Hp), lambda i: (0, 0)),                  # w1 (block-diag)
                pl.BlockSpec((1, Hp), lambda i: (0, 0)),                    # b1 (tiled)
                pl.BlockSpec((num_layer, Hp, Hp), lambda i: (0, 0, 0)),     # hidden weights
                pl.BlockSpec((num_layer, 1, Hp), lambda i: (0, 0, 0)),      # hidden biases
                pl.BlockSpec((Hp, outp), lambda i: (0, 0)),                 # w3 (block-diag)
                pl.BlockSpec((1, outp), lambda i: (0, 0)),                  # b3 (tiled)
            ],
            out_specs=pl.BlockSpec((tb, outp), lambda i: (i, 0)),           # packed output tile
        ),
        compiler_params=pltpu.CompilerParams(
            dimension_semantics=("parallel",)),
        cost_estimate=cost,
    )(yp, w1p, b1p, wbp, bbp, w3p, b3p)

    # unpack [bpk, pack*3] -> [B_pad, 3] and drop padding rows
    return out_packed.reshape(B_pad, OUT_FEATURES)[:B]


def init_params(key, neurons=NEURONS_PER_LAYER, num_layer=NUM_LAYER):
    """Deterministic synthetic parameter init (uniform, PyTorch-Linear-like scale)."""
    ks = jax.random.split(key, 6)

    def uni(k, shape, fan_in):
        bound = 1.0 / jnp.sqrt(float(fan_in))
        return jax.random.uniform(k, shape, jnp.float32, -bound, bound)

    w1 = uni(ks[0], (IN_FEATURES, neurons), IN_FEATURES)     # stored [in, out]
    b1 = uni(ks[1], (1, neurons), IN_FEATURES)
    wb = uni(ks[2], (num_layer, neurons, neurons), neurons)
    bb = uni(ks[3], (num_layer, neurons), neurons)
    w3 = uni(ks[4], (neurons, OUT_FEATURES), neurons)
    b3 = uni(ks[5], (1, OUT_FEATURES), neurons)
    return (w1, b1, wb, bb, w3, b3)


def reference(y, params):
    """Pure-JAX reference for sanity checking."""
    w1, b1, wb, bb, w3, b3 = params
    h = _softplus(y @ w1 + b1, 1000.0)
    for i in range(wb.shape[0]):
        h = _softplus(h @ wb[i] + bb[i], 10.0)
    return h @ w3 + b3


if __name__ == "__main__":
    key = jax.random.PRNGKey(0)
    k_y, k_p = jax.random.split(key)

    B = 16
    y = jax.random.normal(k_y, (B, IN_FEATURES), jnp.float32)
    params = init_params(k_p)

    out = mlp_pure_simple(y, params)
    out = jax.block_until_ready(out)

    ref = reference(y, params)
    assert out.shape == (B, OUT_FEATURES)
    assert jnp.allclose(out, ref, atol=1e-4, rtol=1e-4)

    print("KERNEL_OK")
</pallas_src>

<mosaic_0001>
module attributes {stable_mosaic.version = 11 : i64} {
  func.func @mlp_kernel(%arg0: i32, %arg1: memref<8x36xf32, #tpu.memory_space<vmem>>, %arg2: memref<36x128xf32, #tpu.memory_space<vmem>>, %arg3: memref<1x128xf32, #tpu.memory_space<vmem>>, %arg4: memref<4x128x128xf32, #tpu.memory_space<vmem>>, %arg5: memref<4x1x128xf32, #tpu.memory_space<vmem>>, %arg6: memref<128x12xf32, #tpu.memory_space<vmem>>, %arg7: memref<1x12xf32, #tpu.memory_space<vmem>>, %arg8: memref<8x12xf32, #tpu.memory_space<vmem>>) attributes {dimension_semantics = [#tpu.dimension_semantics<parallel>], iteration_bounds = array<i64: 1>, scalar_prefetch = 0 : i64, scratch_operands = 0 : i64, tpu.core_type = #tpu.core_type<tc>, window_params = [{transform_indices = @transform_0, window_bounds = array<i64: 8, 36>}, {pipeline_mode = #tpu.pipeline_mode<synchronous>, transform_indices = @transform_1, window_bounds = array<i64: 36, 128>}, {pipeline_mode = #tpu.pipeline_mode<synchronous>, transform_indices = @transform_2, window_bounds = array<i64: 1, 128>}, {pipeline_mode = #tpu.pipeline_mode<synchronous>, transform_indices = @transform_3, window_bounds = array<i64: 4, 128, 128>}, {pipeline_mode = #tpu.pipeline_mode<synchronous>, transform_indices = @transform_4, window_bounds = array<i64: 4, 1, 128>}, {pipeline_mode = #tpu.pipeline_mode<synchronous>, transform_indices = @transform_5, window_bounds = array<i64: 128, 12>}, {pipeline_mode = #tpu.pipeline_mode<synchronous>, transform_indices = @transform_6, window_bounds = array<i64: 1, 12>}, {transform_indices = @transform_7, window_bounds = array<i64: 8, 12>}]} {
    %c0 = arith.constant 0 : index
    %c0_0 = arith.constant 0 : index
    %0 = vector.load %arg1[%c0, %c0_0] : memref<8x36xf32, #tpu.memory_space<vmem>>, vector<8x36xf32>
    %c0_1 = arith.constant 0 : index
    %c0_2 = arith.constant 0 : index
    %1 = vector.load %arg2[%c0_1, %c0_2] : memref<36x128xf32, #tpu.memory_space<vmem>>, vector<36x128xf32>
    %cst = arith.constant dense<0.000000e+00> : vector<8x128xf32>
    %2 = tpu.matmul %0, %1, %cst {dimension_numbers = #tpu.dot_dimension_numbers<[1], [0], [0], [1], [0, 0, 1, 1], [], []>} : vector<8x36xf32>, vector<36x128xf32>, vector<8x128xf32> -> vector<8x128xf32>
    %c0_3 = arith.constant 0 : index
    %c0_4 = arith.constant 0 : index
    %3 = vector.load %arg3[%c0_3, %c0_4] : memref<1x128xf32, #tpu.memory_space<vmem>>, vector<1x128xf32>
    %4 = vector.broadcast %3 : vector<1x128xf32> to vector<8x128xf32>
    %5 = arith.addf %2, %4 : vector<8x128xf32>
    %cst_5 = arith.constant 1.000000e+03 : f32
    %6 = vector.broadcast %cst_5 : f32 to vector<8x128xf32>
    %7 = arith.mulf %5, %6 : vector<8x128xf32>
    %cst_6 = arith.constant 0.000000e+00 : f32
    %8 = vector.broadcast %cst_6 : f32 to vector<8x128xf32>
    %9 = arith.maximumf %5, %8 : vector<8x128xf32>
    %10 = math.absf %7 : vector<8x128xf32>
    %cst_7 = arith.constant 0.000000e+00 : f32
    %11 = vector.broadcast %cst_7 : f32 to vector<8x128xf32>
    %12 = arith.subf %11, %10 : vector<8x128xf32>
    %13 = math.exp %12 : vector<8x128xf32>
    %cst_8 = arith.constant 1.000000e+00 : f32
    %14 = vector.broadcast %cst_8 : f32 to vector<8x128xf32>
    %15 = arith.addf %14, %13 : vector<8x128xf32>
    %16 = math.log %15 : vector<8x128xf32>
    %cst_9 = arith.constant 1.000000e-03 : f32
    %17 = vector.broadcast %cst_9 : f32 to vector<8x128xf32>
    %18 = arith.mulf %16, %17 : vector<8x128xf32>
    %19 = arith.addf %9, %18 : vector<8x128xf32>
    %cst_10 = arith.constant 2.000000e+01 : f32
    %20 = vector.broadcast %cst_10 : f32 to vector<8x128xf32>
    %21 = arith.cmpf ogt, %7, %20 : vector<8x128xf32>
    %22 = arith.select %21, %5, %19 : vector<8x128xi1>, vector<8x128xf32>
    %c0_11 = arith.constant 0 : index
    %c0_12 = arith.constant 0 : index
    %c0_13 = arith.constant 0 : index
    %23 = vector.load %arg4[%c0_11, %c0_12, %c0_13] : memref<4x128x128xf32, #tpu.memory_space<vmem>>, vector<1x128x128xf32>
    %24 = vector.shape_cast %23 : vector<1x128x128xf32> to vector<128x128xf32>
    %cst_14 = arith.constant dense<0.000000e+00> : vector<8x128xf32>
    %25 = tpu.matmul %22, %24, %cst_14 {dimension_numbers = #tpu.dot_dimension_numbers<[1], [0], [0], [1], [0, 0, 1, 1], [], []>} : vector<8x128xf32>, vector<128x128xf32>, vector<8x128xf32> -> vector<8x128xf32>
    %c0_15 = arith.constant 0 : index
    %c0_16 = arith.constant 0 : index
    %c0_17 = arith.constant 0 : index
    %26 = vector.load %arg5[%c0_15, %c0_16, %c0_17] : memref<4x1x128xf32, #tpu.memory_space<vmem>>, vector<1x1x128xf32>
    %27 = vector.shape_cast %26 : vector<1x1x128xf32> to vector<1x128xf32>
    %28 = vector.broadcast %27 : vector<1x128xf32> to vector<8x128xf32>
    %29 = arith.addf %25, %28 : vector<8x128xf32>
    %cst_18 = arith.constant 1.000000e+01 : f32
    %30 = vector.broadcast %cst_18 : f32 to vector<8x128xf32>
    %31 = arith.mulf %29, %30 : vector<8x128xf32>
    %cst_19 = arith.constant 0.000000e+00 : f32
    %32 = vector.broadcast %cst_19 : f32 to vector<8x128xf32>
    %33 = arith.maximumf %29, %32 : vector<8x128xf32>
    %34 = math.absf %31 : vector<8x128xf32>
    %cst_20 = arith.constant 0.000000e+00 : f32
    %35 = vector.broadcast %cst_20 : f32 to vector<8x128xf32>
    %36 = arith.subf %35, %34 : vector<8x128xf32>
    %37 = math.exp %36 : vector<8x128xf32>
    %cst_21 = arith.constant 1.000000e+00 : f32
    %38 = vector.broadcast %cst_21 : f32 to vector<8x128xf32>
    %39 = arith.addf %38, %37 : vector<8x128xf32>
    %40 = math.log %39 : vector<8x128xf32>
    %cst_22 = arith.constant 1.000000e-01 : f32
    %41 = vector.broadcast %cst_22 : f32 to vector<8x128xf32>
    %42 = arith.mulf %40, %41 : vector<8x128xf32>
    %43 = arith.addf %33, %42 : vector<8x128xf32>
    %cst_23 = arith.constant 2.000000e+01 : f32
    %44 = vector.broadcast %cst_23 : f32 to vector<8x128xf32>
    %45 = arith.cmpf ogt, %31, %44 : vector<8x128xf32>
    %46 = arith.select %45, %29, %43 : vector<8x128xi1>, vector<8x128xf32>
    %c1 = arith.constant 1 : index
    %c0_24 = arith.constant 0 : index
    %c0_25 = arith.constant 0 : index
    %47 = vector.load %arg4[%c1, %c0_24, %c0_25] : memref<4x128x128xf32, #tpu.memory_space<vmem>>, vector<1x128x128xf32>
    %48 = vector.shape_cast %47 : vector<1x128x128xf32> to vector<128x128xf32>
    %cst_26 = arith.constant dense<0.000000e+00> : vector<8x128xf32>
    %49 = tpu.matmul %46, %48, %cst_26 {dimension_numbers = #tpu.dot_dimension_numbers<[1], [0], [0], [1], [0, 0, 1, 1], [], []>} : vector<8x128xf32>, vector<128x128xf32>, vector<8x128xf32> -> vector<8x128xf32>
    %c1_27 = arith.constant 1 : index
    %c0_28 = arith.constant 0 : index
    %c0_29 = arith.constant 0 : index
    %50 = vector.load %arg5[%c1_27, %c0_28, %c0_29] : memref<4x1x128xf32, #tpu.memory_space<vmem>>, vector<1x1x128xf32>
    %51 = vector.shape_cast %50 : vector<1x1x128xf32> to vector<1x128xf32>
    %52 = vector.broadcast %51 : vector<1x128xf32> to vector<8x128xf32>
    %53 = arith.addf %49, %52 : vector<8x128xf32>
    %cst_30 = arith.constant 1.000000e+01 : f32
    %54 = vector.broadcast %cst_30 : f32 to vector<8x128xf32>
    %55 = arith.mulf %53, %54 : vector<8x128xf32>
    %cst_31 = arith.constant 0.000000e+00 : f32
    %56 = vector.broadcast %cst_31 : f32 to vector<8x128xf32>
    %57 = arith.maximumf %53, %56 : vector<8x128xf32>
    %58 = math.absf %55 : vector<8x128xf32>
    %cst_32 = arith.constant 0.000000e+00 : f32
    %59 = vector.broadcast %cst_32 : f32 to vector<8x128xf32>
    %60 = arith.subf %59, %58 : vector<8x128xf32>
    %61 = math.exp %60 : vector<8x128xf32>
    %cst_33 = arith.constant 1.000000e+00 : f32
    %62 = vector.broadcast %cst_33 : f32 to vector<8x128xf32>
    %63 = arith.addf %62, %61 : vector<8x128xf32>
    %64 = math.log %63 : vector<8x128xf32>
    %cst_34 = arith.constant 1.000000e-01 : f32
    %65 = vector.broadcast %cst_34 : f32 to vector<8x128xf32>
    %66 = arith.mulf %64, %65 : vector<8x128xf32>
    %67 = arith.addf %57, %66 : vector<8x128xf32>
    %cst_35 = arith.constant 2.000000e+01 : f32
    %68 = vector.broadcast %cst_35 : f32 to vector<8x128xf32>
    %69 = arith.cmpf ogt, %55, %68 : vector<8x128xf32>
    %70 = arith.select %69, %53, %67 : vector<8x128xi1>, vector<8x128xf32>
    %c2 = arith.constant 2 : index
    %c0_36 = arith.constant 0 : index
    %c0_37 = arith.constant 0 : index
    %71 = vector.load %arg4[%c2, %c0_36, %c0_37] : memref<4x128x128xf32, #tpu.memory_space<vmem>>, vector<1x128x128xf32>
    %72 = vector.shape_cast %71 : vector<1x128x128xf32> to vector<128x128xf32>
    %cst_38 = arith.constant dense<0.000000e+00> : vector<8x128xf32>
    %73 = tpu.matmul %70, %72, %cst_38 {dimension_numbers = #tpu.dot_dimension_numbers<[1], [0], [0], [1], [0, 0, 1, 1], [], []>} : vector<8x128xf32>, vector<128x128xf32>, vector<8x128xf32> -> vector<8x128xf32>
    %c2_39 = arith.constant 2 : index
    %c0_40 = arith.constant 0 : index
    %c0_41 = arith.constant 0 : index
    %74 = vector.load %arg5[%c2_39, %c0_40, %c0_41] : memref<4x1x128xf32, #tpu.memory_space<vmem>>, vector<1x1x128xf32>
    %75 = vector.shape_cast %74 : vector<1x1x128xf32> to vector<1x128xf32>
    %76 = vector.broadcast %75 : vector<1x128xf32> to vector<8x128xf32>
    %77 = arith.addf %73, %76 : vector<8x128xf32>
    %cst_42 = arith.constant 1.000000e+01 : f32
    %78 = vector.broadcast %cst_42 : f32 to vector<8x128xf32>
    %79 = arith.mulf %77, %78 : vector<8x128xf32>
    %cst_43 = arith.constant 0.000000e+00 : f32
    %80 = vector.broadcast %cst_43 : f32 to vector<8x128xf32>
    %81 = arith.maximumf %77, %80 : vector<8x128xf32>
    %82 = math.absf %79 : vector<8x128xf32>
    %cst_44 = arith.constant 0.000000e+00 : f32
    %83 = vector.broadcast %cst_44 : f32 to vector<8x128xf32>
    %84 = arith.subf %83, %82 : vector<8x128xf32>
    %85 = math.exp %84 : vector<8x128xf32>
    %cst_45 = arith.constant 1.000000e+00 : f32
    %86 = vector.broadcast %cst_45 : f32 to vector<8x128xf32>
    %87 = arith.addf %86, %85 : vector<8x128xf32>
    %88 = math.log %87 : vector<8x128xf32>
    %cst_46 = arith.constant 1.000000e-01 : f32
    %89 = vector.broadcast %cst_46 : f32 to vector<8x128xf32>
    %90 = arith.mulf %88, %89 : vector<8x128xf32>
    %91 = arith.addf %81, %90 : vector<8x128xf32>
    %cst_47 = arith.constant 2.000000e+01 : f32
    %92 = vector.broadcast %cst_47 : f32 to vector<8x128xf32>
    %93 = arith.cmpf ogt, %79, %92 : vector<8x128xf32>
    %94 = arith.select %93, %77, %91 : vector<8x128xi1>, vector<8x128xf32>
    %c3 = arith.constant 3 : index
    %c0_48 = arith.constant 0 : index
    %c0_49 = arith.constant 0 : index
    %95 = vector.load %arg4[%c3, %c0_48, %c0_49] : memref<4x128x128xf32, #tpu.memory_space<vmem>>, vector<1x128x128xf32>
    %96 = vector.shape_cast %95 : vector<1x128x128xf32> to vector<128x128xf32>
    %cst_50 = arith.constant dense<0.000000e+00> : vector<8x128xf32>
    %97 = tpu.matmul %94, %96, %cst_50 {dimension_numbers = #tpu.dot_dimension_numbers<[1], [0], [0], [1], [0, 0, 1, 1], [], []>} : vector<8x128xf32>, vector<128x128xf32>, vector<8x128xf32> -> vector<8x128xf32>
    %c3_51 = arith.constant 3 : index
    %c0_52 = arith.constant 0 : index
    %c0_53 = arith.constant 0 : index
    %98 = vector.load %arg5[%c3_51, %c0_52, %c0_53] : memref<4x1x128xf32, #tpu.memory_space<vmem>>, vector<1x1x128xf32>
    %99 = vector.shape_cast %98 : vector<1x1x128xf32> to vector<1x128xf32>
    %100 = vector.broadcast %99 : vector<1x128xf32> to vector<8x128xf32>
    %101 = arith.addf %97, %100 : vector<8x128xf32>
    %cst_54 = arith.constant 1.000000e+01 : f32
    %102 = vector.broadcast %cst_54 : f32 to vector<8x128xf32>
    %103 = arith.mulf %101, %102 : vector<8x128xf32>
    %cst_55 = arith.constant 0.000000e+00 : f32
    %104 = vector.broadcast %cst_55 : f32 to vector<8x128xf32>
    %105 = arith.maximumf %101, %104 : vector<8x128xf32>
    %106 = math.absf %103 : vector<8x128xf32>
    %cst_56 = arith.constant 0.000000e+00 : f32
    %107 = vector.broadcast %cst_56 : f32 to vector<8x128xf32>
    %108 = arith.subf %107, %106 : vector<8x128xf32>
    %109 = math.exp %108 : vector<8x128xf32>
    %cst_57 = arith.constant 1.000000e+00 : f32
    %110 = vector.broadcast %cst_57 : f32 to vector<8x128xf32>
    %111 = arith.addf %110, %109 : vector<8x128xf32>
    %112 = math.log %111 : vector<8x128xf32>
    %cst_58 = arith.constant 1.000000e-01 : f32
    %113 = vector.broadcast %cst_58 : f32 to vector<8x128xf32>
    %114 = arith.mulf %112, %113 : vector<8x128xf32>
    %115 = arith.addf %105, %114 : vector<8x128xf32>
    %cst_59 = arith.constant 2.000000e+01 : f32
    %116 = vector.broadcast %cst_59 : f32 to vector<8x128xf32>
    %117 = arith.cmpf ogt, %103, %116 : vector<8x128xf32>
    %118 = arith.select %117, %101, %115 : vector<8x128xi1>, vector<8x128xf32>
    %c0_60 = arith.constant 0 : index
    %c0_61 = arith.constant 0 : index
    %119 = vector.load %arg6[%c0_60, %c0_61] : memref<128x12xf32, #tpu.memory_space<vmem>>, vector<128x12xf32>
    %cst_62 = arith.constant dense<0.000000e+00> : vector<8x12xf32>
    %120 = tpu.matmul %118, %119, %cst_62 {dimension_numbers = #tpu.dot_dimension_numbers<[1], [0], [0], [1], [0, 0, 1, 1], [], []>} : vector<8x128xf32>, vector<128x12xf32>, vector<8x12xf32> -> vector<8x12xf32>
    %c0_63 = arith.constant 0 : index
    %c0_64 = arith.constant 0 : index
    %121 = vector.load %arg7[%c0_63, %c0_64] : memref<1x12xf32, #tpu.memory_space<vmem>>, vector<1x12xf32>
    %122 = vector.broadcast %121 : vector<1x12xf32> to vector<8x12xf32>
    %123 = arith.addf %120, %122 : vector<8x12xf32>
    %c0_65 = arith.constant 0 : index
    %c0_66 = arith.constant 0 : index
    %124 = vector.load %arg8[%c0_65, %c0_66] : memref<8x12xf32, #tpu.memory_space<vmem>>, vector<8x12xf32>
    tpu.vector_store %arg8[%c0_65, %c0_66], %123 {strides = array<i32>} : memref<8x12xf32, #tpu.memory_space<vmem>>, vector<8x12xf32>,
    return
  }
  func.func @transform_0(%arg0: i32) -> (i32, i32) {
    %c0_i32 = arith.constant 0 : i32
    %c0_i32_0 = arith.constant 0 : i32
    return %arg0, %c0_i32 : i32, i32
  }
  func.func @transform_1(%arg0: i32) -> (i32, i32) {
    %c0_i32 = arith.constant 0 : i32
    %c0_i32_0 = arith.constant 0 : i32
    %c0_i32_1 = arith.constant 0 : i32
    return %c0_i32, %c0_i32_0 : i32, i32
  }
  func.func @transform_2(%arg0: i32) -> (i32, i32) {
    %c0_i32 = arith.constant 0 : i32
    %c0_i32_0 = arith.constant 0 : i32
    %c0_i32_1 = arith.constant 0 : i32
    return %c0_i32, %c0_i32_0 : i32, i32
  }
  func.func @transform_3(%arg0: i32) -> (i32, i32, i32) {
    %c0_i32 = arith.constant 0 : i32
    %c0_i32_0 = arith.constant 0 : i32
    %c0_i32_1 = arith.constant 0 : i32
    %c0_i32_2 = arith.constant 0 : i32
    return %c0_i32, %c0_i32_0, %c0_i32_1 : i32, i32, i32
  }
  func.func @transform_4(%arg0: i32) -> (i32, i32, i32) {
    %c0_i32 = arith.constant 0 : i32
    %c0_i32_0 = arith.constant 0 : i32
    %c0_i32_1 = arith.constant 0 : i32
    %c0_i32_2 = arith.constant 0 : i32
    return %c0_i32, %c0_i32_0, %c0_i32_1 : i32, i32, i32
  }
  func.func @transform_5(%arg0: i32) -> (i32, i32) {
    %c0_i32 = arith.constant 0 : i32
    %c0_i32_0 = arith.constant 0 : i32
    %c0_i32_1 = arith.constant 0 : i32
    return %c0_i32, %c0_i32_0 : i32, i32
  }
  func.func @transform_6(%arg0: i32) -> (i32, i32) {
    %c0_i32 = arith.constant 0 : i32
    %c0_i32_0 = arith.constant 0 : i32
    %c0_i32_1 = arith.constant 0 : i32
    return %c0_i32, %c0_i32_0 : i32, i32
  }
  func.func @transform_7(%arg0: i32) -> (i32, i32) {
    %c0_i32 = arith.constant 0 : i32
    %c0_i32_0 = arith.constant 0 : i32
    return %arg0, %c0_i32 : i32, i32
  }
}

</mosaic_0001>

<llo_original>
// kernel: tpu_custom_call.1
$region0: #{tpu_custom_call.1}
  #allocation0 [shape = 'u32[]', space=smem, size = 0x4, offset = 0x4, fixed_abs, tag = 'smem constant byte address 0x4 - core index']
  #allocation1 [shape = 'u32[72,128]{1,0:T(1,128)}', space=vmem, size = 0x9000, scoped, tag = 'internal scratch']
  %s0 = inlined_call_operand.vmem [shape: f32[8,36], index: 0, kind: input, shape index: {}]
  %s1 = inlined_call_operand.vmem [shape: f32[36,128], index: 1, kind: input, shape index: {}]
  %s2 = inlined_call_operand.vmem [shape: f32[1,128], index: 2, kind: input, shape index: {}]
  %s3 = inlined_call_operand.hbm [shape: f32[4,128,128], index: 3, kind: input, shape index: {}]
  %s4 = inlined_call_operand.vmem [shape: f32[4,1,128], index: 4, kind: input, shape index: {}]
  %s5 = inlined_call_operand.vmem [shape: f32[128,12], index: 5, kind: input, shape index: {}]
  %s6 = inlined_call_operand.vmem [shape: f32[1,12], index: 6, kind: input, shape index: {}]
  %s7 = inlined_call_operand.hbm [shape: f32[8,12], index: 7, kind: output, shape index: {}]
  %s8 = sld [smem:[#allocation0]]
  $region42: #{tpu_custom_call.1} parent=0
    _
  %s10 = ssub.s32 1, %s8
  %s11 = scalar_select 0, %s10, %s8
  $region1: #{tpu_custom_call.1} parent=0
    #allocation2 [shape = 'u8[262144]{0}', space=vmem, size = 0x40000, scoped, tag = 'input window, operand 3, single buffered']
    #allocation3 [shape = 's32[1]{0}', space=sflag, size = 0x4, scoped, tag = 'scoped memory for tpu_custom_call.1']
    #allocation4 [shape = 's32[1]{0}', space=sflag, size = 0x4, scoped, tag = 'scoped memory for tpu_custom_call.1']
    #allocation5 [shape = 'u8[4096]{0}', space=vmem, size = 0x1000, scoped, tag = 'output window, operand 0, single buffered']
    %12 = vsyncpa [#allocation3], 0
    %13 = vsyncpa [#allocation4], 0
    // Predicated region
    $region2: #{tpu_custom_call.1} parent=1 // pred_check
      _
    $region3: #{tpu_custom_call.1} parent=1 // pred_check_branch
      %15 = sbr.rel (0) target = $region5
    $region4: #{tpu_custom_call.1} parent=1 // pred_region
      _
    $region5: #{tpu_custom_call.1} parent=1 // pred_fallthru
      _
    // Predicated region
    $region6: #{tpu_custom_call.1} parent=1 // pred_check
      _
    $region7: #{tpu_custom_call.1} parent=1 // pred_check_branch
      %17 = sbr.rel (0) target = $region9
    $region8: #{tpu_custom_call.1} parent=1 // pred_region
      _
    $region9: #{tpu_custom_call.1} parent=1 // pred_fallthru
      _
    // Predicated region
    $region10: #{tpu_custom_call.1} parent=1 // pred_check
      _
    $region11: #{tpu_custom_call.1} parent=1 // pred_check_branch
      %19 = sbr.rel (0) target = $region13
    $region12: #{tpu_custom_call.1} parent=1 // pred_region
      _
    $region13: #{tpu_custom_call.1} parent=1 // pred_fallthru
      _
    // Predicated region
    $region14: #{tpu_custom_call.1} parent=1 // pred_check
      _
    $region15: #{tpu_custom_call.1} parent=1 // pred_check_branch
      %21 = sbr.rel (0) target = $region17
    $region16: #{tpu_custom_call.1} parent=1 // pred_region
      %23 = vsyncadd [#allocation3], 0
      %s24 = sshll.u32 %s3, 4
      %s25 = int_to_ptr.hbm [resolvable:$true] %s24
      %s26 = sshll.u32 [#allocation2], 4
      %s27 = int_to_ptr.vmem [resolvable:$true] %s26
      %32 = dma.hbm_to_vmem [thread:$0]  %s25, 8192, %s27, [#allocation3], 128, 128, 8
    $region17: #{tpu_custom_call.1} parent=1 // pred_fallthru
      _
    // Predicated region
    $region18: #{tpu_custom_call.1} parent=1 // pred_check
      _
    $region19: #{tpu_custom_call.1} parent=1 // pred_check_branch
      %34 = sbr.rel (0) target = $region21
    $region20: #{tpu_custom_call.1} parent=1 // pred_region
      _
    $region21: #{tpu_custom_call.1} parent=1 // pred_fallthru
      _
    // Predicated region
    $region22: #{tpu_custom_call.1} parent=1 // pred_check
      _
    $region23: #{tpu_custom_call.1} parent=1 // pred_check_branch
      %36 = sbr.rel (0) target = $region25
    $region24: #{tpu_custom_call.1} parent=1 // pred_region
      _
    $region25: #{tpu_custom_call.1} parent=1 // pred_fallthru
      _
    // Predicated region
    $region26: #{tpu_custom_call.1} parent=1 // pred_check
      _
    $region27: #{tpu_custom_call.1} parent=1 // pred_check_branch
      %38 = sbr.rel (0) target = $region29
    $region28: #{tpu_custom_call.1} parent=1 // pred_region
      _
    $region29: #{tpu_custom_call.1} parent=1 // pred_fallthru
      _
    // Predicated region
    $region30: #{tpu_custom_call.1} parent=1 // pred_check
      _
    $region31: #{tpu_custom_call.1} parent=1 // pred_check_branch
      %40 = sbr.rel (0) target = $region33
    $region32: #{tpu_custom_call.1} parent=1 // pred_region
      %42 = dma.done [#allocation3], 8192
    $region33: #{tpu_custom_call.1} parent=1 // pred_fallthru
      _
    %v43 = vld [vmem:[%s0] sm:$0xff]
    %v44 = vld [vmem:[%s1] sm:$0xff]
    %v45 = vld [vmem:[%s1 + $0x8] sm:$0xff]
    %v46 = vld [vmem:[%s1 + $0x10] sm:$0xff]
    %v47 = vld [vmem:[%s1 + $0x18] sm:$0xff]
    %v48 = vld [vmem:[%s1 + $0x20] sm:$0xf]
    %v49 = vld [vmem:[%s2] sm:$0x1]
    %v51 = vperm.slane %v49, 0
    %vm53 = vcmask 293888
    %v55 = vsel %vm53, %v43, 0
    %vm57 = vcmask 1043456
    %v59 = vsel %vm57, %v48, 0
    %61 = vmatpush.msra.mxu0 0.0
    %62 = vmatpush.msra.mxu0 0.0
    %63 = vmatpush.msra.mxu0 0.0
    %64 = vmatpush.msra.mxu0 0.0
    %65 = vmatpush.msra.mxu0 0.0
    %66 = vmatpush.msra.mxu0 0.0
    %67 = vmatpush.msra.mxu0 0.0
    %68 = vmatpush.msra.mxu0 0.0
    %69 = vmatpush.msra.mxu0 0.0
    %70 = vmatpush.msra.mxu0 0.0
    %71 = vmatpush.msra.mxu0 0.0
    %72 = vmatpush.msra.mxu0 %v59
    %73 = vmatpush.msra.mxu0 %v47
    %74 = vmatpush.msra.mxu0 %v46
    %75 = vmatpush.msra.mxu0 %v45
    %76 = vmatpush.msra.mxu0 %v44
    %77 = vmatmul.f32.gmra.mxu0 %v55
    %v78 = vpop.f32.mrf.mxu0
    %v79 = vadd.f32 %v51, %v78
    %80 = vdwg.mxu0
    %v81 = vmul.f32 %v79, 1000.0
    %v82 = vmax.f32 %v79, 0.0
    %v83 = vand.u32 2147483647, %v81
    %v84 = vsub.f32 0.0, %v83
    %v85 = vmul.f32 %v84, 1.442695
    %v86 = vpow.pop %v85
    %v87 = vadd.f32 %v86, 1.0
    %v88 = vlog2.pop %v87
    %v89 = vmul.f32 %v88, 0.6931472
    %v90 = vmul.f32 %v89, 0.001
    %v91 = vadd.f32 %v82, %v90
    %vm92 = vcmp.gt.f32.partialorder %v81, 20.0
    %v93 = vsel %vm92, %v79, %v91
    %v94 = vld [vmem:[#allocation2] sm:$0xff]
    %v95 = vld [vmem:[#allocation2 + $0x8] sm:$0xff]
    %v96 = vld [vmem:[#allocation2 + $0x10] sm:$0xff]
    %v97 = vld [vmem:[#allocation2 + $0x18] sm:$0xff]
    %v98 = vld [vmem:[#allocation2 + $0x20] sm:$0xff]
    %v99 = vld [vmem:[#allocation2 + $0x28] sm:$0xff]
    %v100 = vld [vmem:[#allocation2 + $0x30] sm:$0xff]
    %v101 = vld [vmem:[#allocation2 + $0x38] sm:$0xff]
    %v102 = vld [vmem:[#allocation2 + $0x40] sm:$0xff]
    %v103 = vld [vmem:[#allocation2 + $0x48] sm:$0xff]
    %v104 = vld [vmem:[#allocation2 + $0x50] sm:$0xff]
    %v105 = vld [vmem:[#allocation2 + $0x58] sm:$0xff]
    %v106 = vld [vmem:[#allocation2 + $0x60] sm:$0xff]
    %v107 = vld [vmem:[#allocation2 + $0x68] sm:$0xff]
    %v108 = vld [vmem:[#allocation2 + $0x70] sm:$0xff]
    %v109 = vld [vmem:[#allocation2 + $0x78] sm:$0xff]
    %v110 = vld [vmem:[%s4] sm:$0x1]
    %v112 = vperm.slane %v110, 0
    %114 = vmatpush.msra.mxu0 %v109
    %115 = vmatpush.msra.mxu0 %v108
    %116 = vmatpush.msra.mxu0 %v107
    %117 = vmatpush.msra.mxu0 %v106
    %118 = vmatpush.msra.mxu0 %v105
    %119 = vmatpush.msra.mxu0 %v104
    %120 = vmatpush.msra.mxu0 %v103
    %121 = vmatpush.msra.mxu0 %v102
    %122 = vmatpush.msra.mxu0 %v101
    %123 = vmatpush.msra.mxu0 %v100
    %124 = vmatpush.msra.mxu0 %v99
    %125 = vmatpush.msra.mxu0 %v98
    %126 = vmatpush.msra.mxu0 %v97
    %127 = vmatpush.msra.mxu0 %v96
    %128 = vmatpush.msra.mxu0 %v95
    %129 = vmatpush.msra.mxu0 %v94
    %130 = vmatmul.f32.gmra.mxu0 %v93
    %v131 = vpop.f32.mrf.mxu0
    %v132 = vadd.f32 %v112, %v131
    %133 = vdwg.mxu0
    %v134 = vmul.f32 %v132, 10.0
    %v135 = vmax.f32 %v132, 0.0
    %v136 = vand.u32 2147483647, %v134
    %v137 = vsub.f32 0.0, %v136
    %v138 = vmul.f32 %v137, 1.442695
    %v139 = vpow.pop %v138
    %v140 = vadd.f32 %v139, 1.0
    %v141 = vlog2.pop %v140
    %v142 = vmul.f32 %v141, 0.6931472
    %v143 = vmul.f32 %v142, 0.1
    %v144 = vadd.f32 %v135, %v143
    %vm145 = vcmp.gt.f32.partialorder %v134, 20.0
    %v146 = vsel %vm145, %v132, %v144
    %s147 = scalar_lea.vmem [#allocation2], 128
    %v148 = vld [vmem:[%s147] sm:$0xff]
    %v149 = vld [vmem:[%s147 + $0x8] sm:$0xff]
    %v150 = vld [vmem:[%s147 + $0x10] sm:$0xff]
    %v151 = vld [vmem:[%s147 + $0x18] sm:$0xff]
    %v152 = vld [vmem:[%s147 + $0x20] sm:$0xff]
    %v153 = vld [vmem:[%s147 + $0x28] sm:$0xff]
    %v154 = vld [vmem:[%s147 + $0x30] sm:$0xff]
    %v155 = vld [vmem:[%s147 + $0x38] sm:$0xff]
    %v156 = vld [vmem:[%s147 + $0x40] sm:$0xff]
    %v157 = vld [vmem:[%s147 + $0x48] sm:$0xff]
    %v158 = vld [vmem:[%s147 + $0x50] sm:$0xff]
    %v159 = vld [vmem:[%s147 + $0x58] sm:$0xff]
    %v160 = vld [vmem:[%s147 + $0x60] sm:$0xff]
    %v161 = vld [vmem:[%s147 + $0x68] sm:$0xff]
    %v162 = vld [vmem:[%s147 + $0x70] sm:$0xff]
    %v163 = vld [vmem:[%s147 + $0x78] sm:$0xff]
    %s164 = scalar_lea.vmem %s4, 1
    %v165 = vld [vmem:[%s164] sm:$0x1]
    %v167 = vperm.slane %v165, 0
    %169 = vmatpush.msra.mxu0 %v163
    %170 = vmatpush.msra.mxu0 %v162
    %171 = vmatpush.msra.mxu0 %v161
    %172 = vmatpush.msra.mxu0 %v160
    %173 = vmatpush.msra.mxu0 %v159
    %174 = vmatpush.msra.mxu0 %v158
    %175 = vmatpush.msra.mxu0 %v157
    %176 = vmatpush.msra.mxu0 %v156
    %177 = vmatpush.msra.mxu0 %v155
    %178 = vmatpush.msra.mxu0 %v154
    %179 = vmatpush.msra.mxu0 %v153
    %180 = vmatpush.msra.mxu0 %v152
    %181 = vmatpush.msra.mxu0 %v151
    %182 = vmatpush.msra.mxu0 %v150
    %183 = vmatpush.msra.mxu0 %v149
    %184 = vmatpush.msra.mxu0 %v148
    %185 = vmatmul.f32.gmra.mxu0 %v146
    %v186 = vpop.f32.mrf.mxu0
    %v187 = vadd.f32 %v167, %v186
    %188 = vdwg.mxu0
    %v189 = vmul.f32 %v187, 10.0
    %v190 = vmax.f32 %v187, 0.0
    %v191 = vand.u32 2147483647, %v189
    %v192 = vsub.f32 0.0, %v191
    %v193 = vmul.f32 %v192, 1.442695
    %v194 = vpow.pop %v193
    %v195 = vadd.f32 %v194, 1.0
    %v196 = vlog2.pop %v195
    %v197 = vmul.f32 %v196, 0.6931472
    %v198 = vmul.f32 %v197, 0.1
    %v199 = vadd.f32 %v190, %v198
    %vm200 = vcmp.gt.f32.partialorder %v189, 20.0
    %v201 = vsel %vm200, %v187, %v199
    %s202 = scalar_lea.vmem [#allocation2], 256
    %v203 = vld [vmem:[%s202] sm:$0xff]
    %v204 = vld [vmem:[%s202 + $0x8] sm:$0xff]
    %v205 = vld [vmem:[%s202 + $0x10] sm:$0xff]
    %v206 = vld [vmem:[%s202 + $0x18] sm:$0xff]
    %v207 = vld [vmem:[%s202 + $0x20] sm:$0xff]
    %v208 = vld [vmem:[%s202 + $0x28] sm:$0xff]
    %v209 = vld [vmem:[%s202 + $0x30] sm:$0xff]
    %v210 = vld [vmem:[%s202 + $0x38] sm:$0xff]
    %v211 = vld [vmem:[%s202 + $0x40] sm:$0xff]
    %v212 = vld [vmem:[%s202 + $0x48] sm:$0xff]
    %v213 = vld [vmem:[%s202 + $0x50] sm:$0xff]
    %v214 = vld [vmem:[%s202 + $0x58] sm:$0xff]
    %v215 = vld [vmem:[%s202 + $0x60] sm:$0xff]
    %v216 = vld [vmem:[%s202 + $0x68] sm:$0xff]
    %v217 = vld [vmem:[%s202 + $0x70] sm:$0xff]
    %v218 = vld [vmem:[%s202 + $0x78] sm:$0xff]
    %s219 = scalar_lea.vmem %s4, 2
    %v220 = vld [vmem:[%s219] sm:$0x1]
    %v222 = vperm.slane %v220, 0
    %224 = vmatpush.msra.mxu0 %v218
    %225 = vmatpush.msra.mxu0 %v217
    %226 = vmatpush.msra.mxu0 %v216
    %227 = vmatpush.msra.mxu0 %v215
    %228 = vmatpush.msra.mxu0 %v214
    %229 = vmatpush.msra.mxu0 %v213
    %230 = vmatpush.msra.mxu0 %v212
    %231 = vmatpush.msra.mxu0 %v211
    %232 = vmatpush.msra.mxu0 %v210
    %233 = vmatpush.msra.mxu0 %v209
    %234 = vmatpush.msra.mxu0 %v208
    %235 = vmatpush.msra.mxu0 %v207
    %236 = vmatpush.msra.mxu0 %v206
    %237 = vmatpush.msra.mxu0 %v205
    %238 = vmatpush.msra.mxu0 %v204
    %239 = vmatpush.msra.mxu0 %v203
    %240 = vmatmul.f32.gmra.mxu0 %v201
    %v241 = vpop.f32.mrf.mxu0
    %v242 = vadd.f32 %v222, %v241
    %243 = vdwg.mxu0
    %v244 = vmul.f32 %v242, 10.0
    %v245 = vmax.f32 %v242, 0.0
    %v246 = vand.u32 2147483647, %v244
    %v247 = vsub.f32 0.0, %v246
    %v248 = vmul.f32 %v247, 1.442695
    %v249 = vpow.pop %v248
    %v250 = vadd.f32 %v249, 1.0
    %v251 = vlog2.pop %v250
    %v252 = vmul.f32 %v251, 0.6931472
    %v253 = vmul.f32 %v252, 0.1
    %v254 = vadd.f32 %v245, %v253
    %vm255 = vcmp.gt.f32.partialorder %v244, 20.0
    %v256 = vsel %vm255, %v242, %v254
    %s257 = scalar_lea.vmem [#allocation2], 384
    %v258 = vld [vmem:[%s257] sm:$0xff]
    %v259 = vld [vmem:[%s257 + $0x8] sm:$0xff]
    %v260 = vld [vmem:[%s257 + $0x10] sm:$0xff]
    %v261 = vld [vmem:[%s257 + $0x18] sm:$0xff]
    %v262 = vld [vmem:[%s257 + $0x20] sm:$0xff]
    %v263 = vld [vmem:[%s257 + $0x28] sm:$0xff]
    %v264 = vld [vmem:[%s257 + $0x30] sm:$0xff]
    %v265 = vld [vmem:[%s257 + $0x38] sm:$0xff]
    %v266 = vld [vmem:[%s257 + $0x40] sm:$0xff]
    %v267 = vld [vmem:[%s257 + $0x48] sm:$0xff]
    %v268 = vld [vmem:[%s257 + $0x50] sm:$0xff]
    %v269 = vld [vmem:[%s257 + $0x58] sm:$0xff]
    %v270 = vld [vmem:[%s257 + $0x60] sm:$0xff]
    %v271 = vld [vmem:[%s257 + $0x68] sm:$0xff]
    %v272 = vld [vmem:[%s257 + $0x70] sm:$0xff]
    %v273 = vld [vmem:[%s257 + $0x78] sm:$0xff]
    %s274 = scalar_lea.vmem %s4, 3
    %v275 = vld [vmem:[%s274] sm:$0x1]
    %v277 = vperm.slane %v275, 0
    %279 = vmatpush.msra.mxu0 %v273
    %280 = vmatpush.msra.mxu0 %v272
    %281 = vmatpush.msra.mxu0 %v271
    %282 = vmatpush.msra.mxu0 %v270
    %283 = vmatpush.msra.mxu0 %v269
    %284 = vmatpush.msra.mxu0 %v268
    %285 = vmatpush.msra.mxu0 %v267
    %286 = vmatpush.msra.mxu0 %v266
    %287 = vmatpush.msra.mxu0 %v265
    %288 = vmatpush.msra.mxu0 %v264
    %289 = vmatpush.msra.mxu0 %v263
    %290 = vmatpush.msra.mxu0 %v262
    %291 = vmatpush.msra.mxu0 %v261
    %292 = vmatpush.msra.mxu0 %v260
    %293 = vmatpush.msra.mxu0 %v259
    %294 = vmatpush.msra.mxu0 %v258
    %295 = vmatmul.f32.gmra.mxu0 %v256
    %v296 = vpop.f32.mrf.mxu0
    %v297 = vadd.f32 %v277, %v296
    %298 = vdwg.mxu0
    %v299 = vmul.f32 %v297, 10.0
    %v300 = vmax.f32 %v297, 0.0
    %v301 = vand.u32 2147483647, %v299
    %v302 = vsub.f32 0.0, %v301
    %v303 = vmul.f32 %v302, 1.442695
    %v304 = vpow.pop %v303
    %v305 = vadd.f32 %v304, 1.0
    %v306 = vlog2.pop %v305
    %v307 = vmul.f32 %v306, 0.6931472
    %v308 = vmul.f32 %v307, 0.1
    %v309 = vadd.f32 %v300, %v308
    %vm310 = vcmp.gt.f32.partialorder %v299, 20.0
    %v311 = vsel %vm310, %v297, %v309
    %v312 = vld [vmem:[%s5] sm:$0xff]
    %v313 = vld [vmem:[%s5 + $0x8] sm:$0xff]
    %v314 = vld [vmem:[%s5 + $0x10] sm:$0xff]
    %v315 = vld [vmem:[%s5 + $0x18] sm:$0xff]
    %v316 = vld [vmem:[%s5 + $0x20] sm:$0xff]
    %v317 = vld [vmem:[%s5 + $0x28] sm:$0xff]
    %v318 = vld [vmem:[%s5 + $0x30] sm:$0xff]
    %v319 = vld [vmem:[%s5 + $0x38] sm:$0xff]
    %v320 = vld [vmem:[%s5 + $0x40] sm:$0xff]
    %v321 = vld [vmem:[%s5 + $0x48] sm:$0xff]
    %v322 = vld [vmem:[%s5 + $0x50] sm:$0xff]
    %v323 = vld [vmem:[%s5 + $0x58] sm:$0xff]
    %v324 = vld [vmem:[%s5 + $0x60] sm:$0xff]
    %v325 = vld [vmem:[%s5 + $0x68] sm:$0xff]
    %v326 = vld [vmem:[%s5 + $0x70] sm:$0xff]
    %v327 = vld [vmem:[%s5 + $0x78] sm:$0xff]
    %v328 = vld [vmem:[%s6] sm:$0x1]
    %v330 = vperm.slane %v328, 0
    %332 = vmatpush.msra.mxu0 %v327
    %333 = vmatpush.msra.mxu0 %v326
    %334 = vmatpush.msra.mxu0 %v325
    %335 = vmatpush.msra.mxu0 %v324
    %336 = vmatpush.msra.mxu0 %v323
    %337 = vmatpush.msra.mxu0 %v322
    %338 = vmatpush.msra.mxu0 %v321
    %339 = vmatpush.msra.mxu0 %v320
    %340 = vmatpush.msra.mxu0 %v319
    %341 = vmatpush.msra.mxu0 %v318
    %342 = vmatpush.msra.mxu0 %v317
    %343 = vmatpush.msra.mxu0 %v316
    %344 = vmatpush.msra.mxu0 %v315
    %345 = vmatpush.msra.mxu0 %v314
    %346 = vmatpush.msra.mxu0 %v313
    %347 = vmatpush.msra.mxu0 %v312
    %348 = vmatmul.f32.gmra.mxu0 %v311
    %v349 = vpop.f32.mrf.mxu0
    %v350 = vadd.f32 %v330, %v349
    %351 = vdwg.mxu0
    %vm352 = vcmask 97280
    %353 = vst.msk [vmem:[#allocation5] sm:$0xff] %vm352, %v350
    // Predicated region
    $region34: #{tpu_custom_call.1} parent=1 // pred_check
      _
    $region35: #{tpu_custom_call.1} parent=1 // pred_check_branch
      %355 = sbr.rel (0) target = $region37
    $region36: #{tpu_custom_call.1} parent=1 // pred_region
      %357 = vsyncadd [#allocation4], 0
      %s359 = sshll.u32 [#allocation5], 4
      %s360 = int_to_ptr.vmem [resolvable:$true] %s359
      %s361 = sshll.u32 %s7, 4
      %s362 = int_to_ptr.hbm [resolvable:$true] %s361
      %364 = dma.vmem_to_hbm [thread:$0]  %s360, 128, %s362, [#allocation4]
    $region37: #{tpu_custom_call.1} parent=1 // pred_fallthru
      _
    // Predicated region
    $region38: #{tpu_custom_call.1} parent=1 // pred_check
      _
    $region39: #{tpu_custom_call.1} parent=1 // pred_check_branch
      %366 = sbr.rel (0) target = $region41
    $region40: #{tpu_custom_call.1} parent=1 // pred_region
      %368 = dma.done [#allocation4], 128
    $region41: #{tpu_custom_call.1} parent=1 // pred_fallthru
      _
    %369 = vsyncpa [#allocation3], 1
    %370 = vsyncpa [#allocation4], 1

</llo_original>
